<compile_context>
chip_gen: v5e
topology: v5e:2x2
jax: 0.10.0
libtpu: 0.0.40
codegen_flags: <defaults>
</compile_context>

<pallas_src>
import functools

import jax
import jax.numpy as jnp
from jax.experimental import pallas as pl
from jax.experimental.pallas import tpu as pltpu


def _channel_attn_kernel(x_ref, wk_ref, wv_ref, wq_ref, wp_ref, bp_ref, mask_ref,
                         *rest, has_qkv_bias, n_valid):
    if has_qkv_bias:
        bk_ref, bv_ref, bq_ref, o_ref, g_acc, s_acc, m_scr, be_scr = rest
    else:
        o_ref, g_acc, m_scr, be_scr = rest

    phase = pl.program_id(1)        # 0: accumulate Gram matrix, 1: apply folded matrix
    t = pl.program_id(2)            # N-tile index
    num_t = pl.num_programs(2)

    x = x_ref[0]                    # (tn, C), kept in the input dtype (bf16-friendly)
    f32 = jnp.float32

    @pl.when(phase == 0)
    def _accumulate():
        @pl.when(t == 0)
        def _zero():
            g_acc[...] = jnp.zeros_like(g_acc)
            if has_qkv_bias:
                s_acc[...] = jnp.zeros_like(s_acc)

        # Single MXU op per tile: G[a, b] += sum_n x[n, a] * x[n, b]
        # (contract the row dim; no explicit transpose).
        g_acc[...] += jax.lax.dot_general(
            x, x, dimension_numbers=(((0,), (0,)), ((), ())),
            preferred_element_type=f32)
        if has_qkv_bias:
            s_acc[...] += jnp.sum(x.astype(f32), axis=0, keepdims=True)

        @pl.when(t == num_t - 1)
        def _finalize():
            # Tiny once-per-batch epilogue, all in f32 (O(C^2)/O(C^3) work).
            wk = wk_ref[...].astype(f32)      # (C, C), qk scale pre-folded on the host
            wv = wv_ref[...].astype(f32)
            wq = wq_ref[...].astype(f32)
            wp = wp_ref[...].astype(f32)
            g = g_acc[...]

            # S = Wk^T G Wv  ( == sum_n k[n]^T v[n] for the no-bias case ).
            s_mat = jnp.dot(
                jax.lax.dot_general(wk, g, (((0,), (0,)), ((), ())),
                                    preferred_element_type=f32),
                wv, preferred_element_type=f32)

            if has_qkv_bias:
                # With k = x Wk + bk, v = x Wv + bv and s = sum_n x[n, :]:
                #   S += (s Wk)^T bv + bk^T (s Wv) + N * bk^T bv
                # expressed as one tiny (8, C)^T (8, C) matmul (rows padded with zeros).
                srow = s_acc[...]                                       # (1, C)
                bk = bk_ref[...]
                bv = bv_ref[...]
                u = jnp.dot(srow, wk, preferred_element_type=f32)       # (1, C)
                w = jnp.dot(srow, wv, preferred_element_type=f32)       # (1, C)
                c_dim = wk.shape[0]
                zeros6 = jnp.zeros((6, c_dim), f32)
                lhs = jnp.concatenate([u, bk, zeros6], axis=0)          # (8, C)
                rhs = jnp.concatenate([bv, w + float(n_valid) * bv, zeros6], axis=0)
                s_mat = s_mat + jax.lax.dot_general(
                    lhs, rhs, (((0,), (0,)), ((), ())),
                    preferred_element_type=f32)

            # Per-head softmax: off-head entries pushed to -1e30 so they vanish,
            # leaving the block-diagonal attention matrix P (C x C).
            s_mat = s_mat + mask_ref[...]
            s_mat = s_mat - jnp.max(s_mat, axis=-1, keepdims=True)
            e = jnp.exp(s_mat)
            p = e / jnp.sum(e, axis=-1, keepdims=True)

            # Fold the entire apply chain into one matrix:
            #   out = ((x Wq + bq) P^T) Wproj + bproj  ==  x M + b_eff
            m = jnp.dot(
                jax.lax.dot_general(wq, p, (((1,), (1,)), ((), ())),
                                    preferred_element_type=f32),
                wp, preferred_element_type=f32)
            if has_qkv_bias:
                bq = bq_ref[...]
                u2 = jax.lax.dot_general(bq, p, (((1,), (1,)), ((), ())),
                                         preferred_element_type=f32)    # (1, C)
                b_eff = jnp.dot(u2, wp, preferred_element_type=f32) + bp_ref[...]
            else:
                b_eff = bp_ref[...]
            m_scr[...] = m.astype(m_scr.dtype)
            be_scr[...] = b_eff

    @pl.when(phase == 1)
    def _apply():
        # Single MXU op per tile.
        out = jnp.dot(x, m_scr[...], preferred_element_type=jnp.float32) + be_scr[...]
        o_ref[0] = out.astype(o_ref.dtype)


def _pick_tile_rows(n, c, itemsize, budget_bytes=20 * 1024 * 1024):
    """Largest N tile whose working set (double-buffered x/out blocks plus a few f32
    row intermediates) stays inside a conservative VMEM budget (v7x only has 64 MiB)."""
    per_row = 4 * c * itemsize + 6 * c * 4
    cap = max(8, budget_bytes // per_row)
    if n <= cap:
        return int(n)
    tile = (cap // 256) * 256            # v6e/v7x MXU prefers >=256-row operands
    if tile == 0:
        tile = max(8, (cap // 8) * 8)
    return int(min(tile, 2048))


def channel_attention(x, wqkv, bqkv, wproj, bproj, num_heads, *, tile_rows=None):
    """ChannelAttention forward.

    x:     (B, D, H, W, C)  channels-last input.
    wqkv:  (3C, C)  torch nn.Linear(dim, 3*dim) weight, output rows ordered [q | k | v].
    bqkv:  (3C,) qkv bias or None (module default qkv_bias=False).
    wproj: (C, C)   torch nn.Linear(dim, dim) weight.
    bproj: (C,)     proj bias.
    """
    B, D, H, W, C = x.shape
    if C % num_heads != 0:
        raise ValueError("C must be divisible by num_heads")
    N = D * H * W
    hd = C // num_heads
    scale = hd ** (-0.5)
    cdt = x.dtype
    f32 = jnp.float32

    # torch Linear computes x @ W.T + b; pre-transpose and fold the qk scale into Wk.
    wq_t = wqkv[:C, :].T.astype(cdt)
    wk_t = (wqkv[C:2 * C, :].T * scale).astype(cdt)
    wv_t = wqkv[2 * C:, :].T.astype(cdt)
    wp_t = wproj.T.astype(cdt)
    bp = bproj.reshape(1, C).astype(f32)

    # Block-diagonal (per-head) additive softmax mask: 0 within a head, -1e30 across.
    head_of = jnp.arange(C, dtype=jnp.int32) // hd
    attn_mask = jnp.where(head_of[:, None] == head_of[None, :], 0.0, -1e30).astype(f32)

    # --- N tiling (sublane-aligned; pad N if the tile does not divide it) ---
    if tile_rows is None:
        tile_rows = _pick_tile_rows(N, C, x.dtype.itemsize)
    if tile_rows >= N:
        tn, n_tiles, n_pad = N, 1, N
    else:
        tn = max(8, (int(tile_rows) // 8) * 8)
        n_tiles = -(-N // tn)
        n_pad = tn * n_tiles

    x_flat = x.reshape(B, N, C)
    if n_pad != N:
        # Zero padding: padded rows contribute exactly zero to the Gram matrix and the
        # row-sum, and the bias correction uses the true N, so no masking is needed.
        x_flat = jnp.pad(x_flat, ((0, 0), (0, n_pad - N), (0, 0)))

    has_qkv_bias = bqkv is not None

    operands = [x_flat, wk_t, wv_t, wq_t, wp_t, bp, attn_mask]
    in_specs = [
        pl.BlockSpec((1, tn, C), lambda b, p, t: (b, t, 0)),   # x tile (read both phases)
        pl.BlockSpec((C, C), lambda b, p, t: (0, 0)),          # Wk (pre-scaled)
        pl.BlockSpec((C, C), lambda b, p, t: (0, 0)),          # Wv
        pl.BlockSpec((C, C), lambda b, p, t: (0, 0)),          # Wq
        pl.BlockSpec((C, C), lambda b, p, t: (0, 0)),          # Wproj
        pl.BlockSpec((1, C), lambda b, p, t: (0, 0)),          # bproj
        pl.BlockSpec((C, C), lambda b, p, t: (0, 0)),          # block-diag softmax mask
    ]
    if has_qkv_bias:
        bq = bqkv[:C].reshape(1, C).astype(f32)
        bk = (bqkv[C:2 * C] * scale).reshape(1, C).astype(f32)
        bv = bqkv[2 * C:].reshape(1, C).astype(f32)
        operands += [bk, bv, bq]
        in_specs += [pl.BlockSpec((1, C), lambda b, p, t: (0, 0))] * 3

    scratch_shapes = [pltpu.VMEM((C, C), f32)]                 # Gram accumulator G
    if has_qkv_bias:
        scratch_shapes.append(pltpu.VMEM((1, C), f32))         # row-sum of x
    scratch_shapes += [
        pltpu.VMEM((C, C), cdt),                               # folded matrix M
        pltpu.VMEM((1, C), f32),                               # folded bias b_eff
    ]

    kernel = functools.partial(
        _channel_attn_kernel,
        has_qkv_bias=has_qkv_bias,
        n_valid=N,
    )

    out = pl.pallas_call(
        kernel,
        out_shape=jax.ShapeDtypeStruct((B, n_pad, C), cdt),
        grid_spec=pltpu.PrefetchScalarGridSpec(
            num_scalar_prefetch=0,
            grid=(B, 2, n_tiles),            # batch x {accumulate, apply} x N-tiles
            in_specs=in_specs,
            # During phase 0 the output block index is held at (b, 0, 0), so nothing is
            # flushed to HBM until phase 1 actually writes the tiles.
            out_specs=pl.BlockSpec((1, tn, C), lambda b, p, t: (b, p * t, 0)),
            scratch_shapes=scratch_shapes,
        ),
        compiler_params=pltpu.CompilerParams(
            dimension_semantics=("parallel", "arbitrary", "arbitrary"),
            vmem_limit_bytes=48 * 1024 * 1024,
        ),
    )(*operands)

    return out[:, :N, :].reshape(B, D, H, W, C)


def channel_attention_ref(x, wqkv, bqkv, wproj, bproj, num_heads):
    """Pure-JAX reference matching the PyTorch forward exactly."""
    B, D, H, W, C = x.shape
    N = D * H * W
    hd = C // num_heads
    scale = hd ** (-0.5)
    xf = x.reshape(B, N, C)
    qkv = jnp.einsum("bnc,oc->bno", xf, wqkv)
    if bqkv is not None:
        qkv = qkv + bqkv
    qkv = qkv.reshape(B, N, 3, num_heads, hd).transpose(2, 0, 3, 1, 4)   # (3,B,nh,N,hd)
    q, k, v = qkv[0], qkv[1], qkv[2]
    k = k * scale
    attn = jnp.einsum("bhni,bhnj->bhij", k, v)                           # (B,nh,hd,hd)
    attn = jax.nn.softmax(attn, axis=-1)
    y = jnp.einsum("bhij,bhnj->bhni", attn, q)                           # (B,nh,N,hd)
    y = y.transpose(0, 2, 1, 3).reshape(B, N, C)
    out = jnp.einsum("bnc,oc->bno", y, wproj) + bproj
    return out.reshape(B, D, H, W, C)


if __name__ == "__main__":
    # --- Config 1: module defaults (qkv_bias=False), N tiled evenly across 4 tiles ---
    B, D, H, W, C = 2, 4, 8, 8, 64
    num_heads = 4                        # head_dim = 16
    k0, k1, k2, k3 = jax.random.split(jax.random.PRNGKey(0), 4)
    x = jax.random.normal(k0, (B, D, H, W, C), dtype=jnp.float32)
    wqkv = jax.random.normal(k1, (3 * C, C), dtype=jnp.float32) * 0.05
    wproj = jax.random.normal(k2, (C, C), dtype=jnp.float32) * 0.05
    bproj = jax.random.normal(k3, (C,), dtype=jnp.float32) * 0.02

    out = channel_attention(x, wqkv, None, wproj, bproj, num_heads, tile_rows=64)
    out = jax.block_until_ready(out)
    ref = channel_attention_ref(x, wqkv, None, wproj, bproj, num_heads)
    assert out.shape == (B, D, H, W, C)
    assert jnp.allclose(out, ref, atol=2e-3, rtol=2e-3), (
        f"config-1 mismatch vs reference (max abs err {jnp.max(jnp.abs(out - ref))})")

    # --- Config 2: qkv_bias=True and a tile that does NOT divide N (padding path) ---
    B2, D2, H2, W2, C2 = 2, 2, 8, 8, 32
    nh2 = 4                              # head_dim = 8, N = 128, tile 48 -> pad to 144
    k4, k5, k6, k7, k8 = jax.random.split(jax.random.PRNGKey(1), 5)
    x2 = jax.random.normal(k4, (B2, D2, H2, W2, C2), dtype=jnp.float32)
    wqkv2 = jax.random.normal(k5, (3 * C2, C2), dtype=jnp.float32) * 0.05
    bqkv2 = jax.random.normal(k6, (3 * C2,), dtype=jnp.float32) * 0.02
    wproj2 = jax.random.normal(k7, (C2, C2), dtype=jnp.float32) * 0.05
    bproj2 = jax.random.normal(k8, (C2,), dtype=jnp.float32) * 0.02

    out2 = channel_attention(x2, wqkv2, bqkv2, wproj2, bproj2, nh2, tile_rows=48)
    out2 = jax.block_until_ready(out2)
    ref2 = channel_attention_ref(x2, wqkv2, bqkv2, wproj2, bproj2, nh2)
    assert jnp.allclose(out2, ref2, atol=2e-3, rtol=2e-3), (
        f"config-2 mismatch vs reference (max abs err {jnp.max(jnp.abs(out2 - ref2))})")

    print("KERNEL_OK")
</pallas_src>

<mosaic_0001>
module attributes {stable_mosaic.version = 11 : i64} {
  func.func @_channel_attn_kernel(%arg0: i32, %arg1: i32, %arg2: i32, %arg3: memref<1x64x64xf32, #tpu.memory_space<vmem>>, %arg4: memref<64x64xf32, #tpu.memory_space<vmem>>, %arg5: memref<64x64xf32, #tpu.memory_space<vmem>>, %arg6: memref<64x64xf32, #tpu.memory_space<vmem>>, %arg7: memref<64x64xf32, #tpu.memory_space<vmem>>, %arg8: memref<1x64xf32, #tpu.memory_space<vmem>>, %arg9: memref<64x64xf32, #tpu.memory_space<vmem>>, %arg10: memref<1x64x64xf32, #tpu.memory_space<vmem>>, %arg11: memref<64x64xf32, #tpu.memory_space<vmem>>, %arg12: memref<64x64xf32, #tpu.memory_space<vmem>>, %arg13: memref<1x64xf32, #tpu.memory_space<vmem>>) attributes {dimension_semantics = [#tpu.dimension_semantics<parallel>, #tpu.dimension_semantics<arbitrary>, #tpu.dimension_semantics<arbitrary>], iteration_bounds = array<i64: 2, 2, 4>, scalar_prefetch = 0 : i64, scratch_operands = 3 : i64, tpu.core_type = #tpu.core_type<tc>, window_params = [{transform_indices = @transform_0, window_bounds = array<i64: 1, 64, 64>}, {pipeline_mode = #tpu.pipeline_mode<synchronous>, transform_indices = @transform_1, window_bounds = array<i64: 64, 64>}, {pipeline_mode = #tpu.pipeline_mode<synchronous>, transform_indices = @transform_2, window_bounds = array<i64: 64, 64>}, {pipeline_mode = #tpu.pipeline_mode<synchronous>, transform_indices = @transform_3, window_bounds = array<i64: 64, 64>}, {pipeline_mode = #tpu.pipeline_mode<synchronous>, transform_indices = @transform_4, window_bounds = array<i64: 64, 64>}, {pipeline_mode = #tpu.pipeline_mode<synchronous>, transform_indices = @transform_5, window_bounds = array<i64: 1, 64>}, {pipeline_mode = #tpu.pipeline_mode<synchronous>, transform_indices = @transform_6, window_bounds = array<i64: 64, 64>}, {transform_indices = @transform_7, window_bounds = array<i64: 1, 64, 64>}]} {
    %c0 = arith.constant 0 : index
    %c0_0 = arith.constant 0 : index
    %c0_1 = arith.constant 0 : index
    %0 = vector.load %arg3[%c0, %c0_0, %c0_1] : memref<1x64x64xf32, #tpu.memory_space<vmem>>, vector<1x64x64xf32>
    %1 = vector.shape_cast %0 : vector<1x64x64xf32> to vector<64x64xf32>
    %c0_i32 = arith.constant 0 : i32
    %2 = arith.cmpi eq, %arg1, %c0_i32 : i32
    %3 = arith.extui %2 : i1 to i32
    %c0_i32_2 = arith.constant 0 : i32
    %4 = arith.cmpi ne, %3, %c0_i32_2 : i32
    scf.if %4 {
      %c0_i32_4 = arith.constant 0 : i32
      %8 = arith.cmpi eq, %arg2, %c0_i32_4 : i32
      %9 = arith.extui %8 : i1 to i32
      %c0_i32_5 = arith.constant 0 : i32
      %10 = arith.cmpi ne, %9, %c0_i32_5 : i32
      scf.if %10 {
        %cst_11 = arith.constant 0.000000e+00 : f32
        %18 = vector.broadcast %cst_11 : f32 to vector<64x64xf32>
        %c0_12 = arith.constant 0 : index
        %c0_13 = arith.constant 0 : index
        %19 = vector.load %arg11[%c0_12, %c0_13] : memref<64x64xf32, #tpu.memory_space<vmem>>, vector<64x64xf32>
        tpu.vector_store %arg11[%c0_12, %c0_13], %18 {strides = array<i32>} : memref<64x64xf32, #tpu.memory_space<vmem>>, vector<64x64xf32>,
      } else {
      }
      %c0_6 = arith.constant 0 : index
      %c0_7 = arith.constant 0 : index
      %11 = vector.load %arg11[%c0_6, %c0_7] : memref<64x64xf32, #tpu.memory_space<vmem>>, vector<64x64xf32>
      %cst = arith.constant dense<0.000000e+00> : vector<64x64xf32>
      %12 = tpu.matmul %1, %1, %cst {dimension_numbers = #tpu.dot_dimension_numbers<[0], [0], [1], [1], [0, 1, 1, 1], [], []>} : vector<64x64xf32>, vector<64x64xf32>, vector<64x64xf32> -> vector<64x64xf32>
      %13 = arith.addf %11, %12 : vector<64x64xf32>
      %c0_8 = arith.constant 0 : index
      %c0_9 = arith.constant 0 : index
      %14 = vector.load %arg11[%c0_8, %c0_9] : memref<64x64xf32, #tpu.memory_space<vmem>>, vector<64x64xf32>
      tpu.vector_store %arg11[%c0_8, %c0_9], %13 {strides = array<i32>} : memref<64x64xf32, #tpu.memory_space<vmem>>, vector<64x64xf32>,
      %c3_i32 = arith.constant 3 : i32
      %15 = arith.cmpi eq, %arg2, %c3_i32 : i32
      %16 = arith.extui %15 : i1 to i32
      %c0_i32_10 = arith.constant 0 : i32
      %17 = arith.cmpi ne, %16, %c0_i32_10 : i32
      scf.if %17 {
        %c0_11 = arith.constant 0 : index
        %c0_12 = arith.constant 0 : index
        %18 = vector.load %arg4[%c0_11, %c0_12] : memref<64x64xf32, #tpu.memory_space<vmem>>, vector<64x64xf32>
        %c0_13 = arith.constant 0 : index
        %c0_14 = arith.constant 0 : index
        %19 = vector.load %arg5[%c0_13, %c0_14] : memref<64x64xf32, #tpu.memory_space<vmem>>, vector<64x64xf32>
        %c0_15 = arith.constant 0 : index
        %c0_16 = arith.constant 0 : index
        %20 = vector.load %arg6[%c0_15, %c0_16] : memref<64x64xf32, #tpu.memory_space<vmem>>, vector<64x64xf32>
        %c0_17 = arith.constant 0 : index
        %c0_18 = arith.constant 0 : index
        %21 = vector.load %arg7[%c0_17, %c0_18] : memref<64x64xf32, #tpu.memory_space<vmem>>, vector<64x64xf32>
        %c0_19 = arith.constant 0 : index
        %c0_20 = arith.constant 0 : index
        %22 = vector.load %arg11[%c0_19, %c0_20] : memref<64x64xf32, #tpu.memory_space<vmem>>, vector<64x64xf32>
        %cst_21 = arith.constant dense<0.000000e+00> : vector<64x64xf32>
        %23 = tpu.matmul %18, %22, %cst_21 {dimension_numbers = #tpu.dot_dimension_numbers<[0], [0], [1], [1], [0, 1, 1, 1], [], []>} : vector<64x64xf32>, vector<64x64xf32>, vector<64x64xf32> -> vector<64x64xf32>
        %cst_22 = arith.constant dense<0.000000e+00> : vector<64x64xf32>
        %24 = tpu.matmul %23, %19, %cst_22 {dimension_numbers = #tpu.dot_dimension_numbers<[1], [0], [0], [1], [0, 0, 1, 1], [], []>} : vector<64x64xf32>, vector<64x64xf32>, vector<64x64xf32> -> vector<64x64xf32>
        %c0_23 = arith.constant 0 : index
        %c0_24 = arith.constant 0 : index
        %25 = vector.load %arg9[%c0_23, %c0_24] : memref<64x64xf32, #tpu.memory_space<vmem>>, vector<64x64xf32>
        %26 = arith.addf %24, %25 : vector<64x64xf32>
        %cst_25 = arith.constant dense<0xFF800000> : vector<64xf32>
        %27 = vector.multi_reduction <maximumf>, %26, %cst_25 [1] : vector<64x64xf32> to vector<64xf32>
        %28 = vector.shape_cast %27 : vector<64xf32> to vector<64x1xf32>
        %29 = vector.broadcast %28 : vector<64x1xf32> to vector<64x64xf32>
        %30 = arith.subf %26, %29 : vector<64x64xf32>
        %31 = math.exp %30 : vector<64x64xf32>
        %cst_26 = arith.constant dense<0.000000e+00> : vector<64xf32>
        %32 = vector.multi_reduction <add>, %31, %cst_26 [1] : vector<64x64xf32> to vector<64xf32>
        %33 = vector.shape_cast %32 : vector<64xf32> to vector<64x1xf32>
        %34 = vector.broadcast %33 : vector<64x1xf32> to vector<64x64xf32>
        %35 = arith.divf %31, %34 : vector<64x64xf32>
        %cst_27 = arith.constant dense<0.000000e+00> : vector<64x64xf32>
        %36 = tpu.matmul %20, %35, %cst_27 {dimension_numbers = #tpu.dot_dimension_numbers<[1], [1], [0], [0], [0, 0, 1, 0], [], []>} : vector<64x64xf32>, vector<64x64xf32>, vector<64x64xf32> -> vector<64x64xf32>
        %cst_28 = arith.constant dense<0.000000e+00> : vector<64x64xf32>
        %37 = tpu.matmul %36, %21, %cst_28 {dimension_numbers = #tpu.dot_dimension_numbers<[1], [0], [0], [1], [0, 0, 1, 1], [], []>} : vector<64x64xf32>, vector<64x64xf32>, vector<64x64xf32> -> vector<64x64xf32>
        %c0_29 = arith.constant 0 : index
        %c0_30 = arith.constant 0 : index
        %38 = vector.load %arg8[%c0_29, %c0_30] : memref<1x64xf32, #tpu.memory_space<vmem>>, vector<1x64xf32>
        %c0_31 = arith.constant 0 : index
        %c0_32 = arith.constant 0 : index
        %39 = vector.load %arg12[%c0_31, %c0_32] : memref<64x64xf32, #tpu.memory_space<vmem>>, vector<64x64xf32>
        tpu.vector_store %arg12[%c0_31, %c0_32], %37 {strides = array<i32>} : memref<64x64xf32, #tpu.memory_space<vmem>>, vector<64x64xf32>,
        %c0_33 = arith.constant 0 : index
        %c0_34 = arith.constant 0 : index
        %40 = vector.load %arg13[%c0_33, %c0_34] : memref<1x64xf32, #tpu.memory_space<vmem>>, vector<1x64xf32>
        tpu.vector_store %arg13[%c0_33, %c0_34], %38 {strides = array<i32>} : memref<1x64xf32, #tpu.memory_space<vmem>>, vector<1x64xf32>,
      } else {
      }
    } else {
    }
    %c1_i32 = arith.constant 1 : i32
    %5 = arith.cmpi eq, %arg1, %c1_i32 : i32
    %6 = arith.extui %5 : i1 to i32
    %c0_i32_3 = arith.constant 0 : i32
    %7 = arith.cmpi ne, %6, %c0_i32_3 : i32
    scf.if %7 {
      %c0_4 = arith.constant 0 : index
      %c0_5 = arith.constant 0 : index
      %8 = vector.load %arg12[%c0_4, %c0_5] : memref<64x64xf32, #tpu.memory_space<vmem>>, vector<64x64xf32>
      %cst = arith.constant dense<0.000000e+00> : vector<64x64xf32>
      %9 = tpu.matmul %1, %8, %cst {dimension_numbers = #tpu.dot_dimension_numbers<[1], [0], [0], [1], [0, 0, 1, 1], [], []>} : vector<64x64xf32>, vector<64x64xf32>, vector<64x64xf32> -> vector<64x64xf32>
      %c0_6 = arith.constant 0 : index
      %c0_7 = arith.constant 0 : index
      %10 = vector.load %arg13[%c0_6, %c0_7] : memref<1x64xf32, #tpu.memory_space<vmem>>, vector<1x64xf32>
      %11 = vector.broadcast %10 : vector<1x64xf32> to vector<64x64xf32>
      %12 = arith.addf %9, %11 : vector<64x64xf32>
      %c0_8 = arith.constant 0 : index
      %c0_9 = arith.constant 0 : index
      %c0_10 = arith.constant 0 : index
      %13 = vector.load %arg10[%c0_8, %c0_9, %c0_10] : memref<1x64x64xf32, #tpu.memory_space<vmem>>, vector<1x64x64xf32>
      %14 = vector.shape_cast %13 : vector<1x64x64xf32> to vector<64x64xf32>
      %15 = vector.shape_cast %12 : vector<64x64xf32> to vector<1x64x64xf32>
      tpu.vector_store %arg10[%c0_8, %c0_9, %c0_10], %15 {strides = array<i32>} : memref<1x64x64xf32, #tpu.memory_space<vmem>>, vector<1x64x64xf32>,
    } else {
    }
    return
  }
  func.func @transform_0(%arg0: i32, %arg1: i32, %arg2: i32) -> (i32, i32, i32) {
    %c0_i32 = arith.constant 0 : i32
    %c0_i32_0 = arith.constant 0 : i32
    return %arg0, %arg2, %c0_i32 : i32, i32, i32
  }
  func.func @transform_1(%arg0: i32, %arg1: i32, %arg2: i32) -> (i32, i32) {
    %c0_i32 = arith.constant 0 : i32
    %c0_i32_0 = arith.constant 0 : i32
    %c0_i32_1 = arith.constant 0 : i32
    return %c0_i32, %c0_i32_0 : i32, i32
  }
  func.func @transform_2(%arg0: i32, %arg1: i32, %arg2: i32) -> (i32, i32) {
    %c0_i32 = arith.constant 0 : i32
    %c0_i32_0 = arith.constant 0 : i32
    %c0_i32_1 = arith.constant 0 : i32
    return %c0_i32, %c0_i32_0 : i32, i32
  }
  func.func @transform_3(%arg0: i32, %arg1: i32, %arg2: i32) -> (i32, i32) {
    %c0_i32 = arith.constant 0 : i32
    %c0_i32_0 = arith.constant 0 : i32
    %c0_i32_1 = arith.constant 0 : i32
    return %c0_i32, %c0_i32_0 : i32, i32
  }
  func.func @transform_4(%arg0: i32, %arg1: i32, %arg2: i32) -> (i32, i32) {
    %c0_i32 = arith.constant 0 : i32
    %c0_i32_0 = arith.constant 0 : i32
    %c0_i32_1 = arith.constant 0 : i32
    return %c0_i32, %c0_i32_0 : i32, i32
  }
  func.func @transform_5(%arg0: i32, %arg1: i32, %arg2: i32) -> (i32, i32) {
    %c0_i32 = arith.constant 0 : i32
    %c0_i32_0 = arith.constant 0 : i32
    %c0_i32_1 = arith.constant 0 : i32
    return %c0_i32, %c0_i32_0 : i32, i32
  }
  func.func @transform_6(%arg0: i32, %arg1: i32, %arg2: i32) -> (i32, i32) {
    %c0_i32 = arith.constant 0 : i32
    %c0_i32_0 = arith.constant 0 : i32
    %c0_i32_1 = arith.constant 0 : i32
    return %c0_i32, %c0_i32_0 : i32, i32
  }
  func.func @transform_7(%arg0: i32, %arg1: i32, %arg2: i32) -> (i32, i32, i32) {
    %0 = arith.muli %arg1, %arg2 : i32
    %c0_i32 = arith.constant 0 : i32
    %c0_i32_0 = arith.constant 0 : i32
    return %arg0, %0, %c0_i32 : i32, i32, i32
  }
}

</mosaic_0001>

<llo_original>
// kernel: tpu_custom_call.1
$region0: #{tpu_custom_call.1}
  #allocation0 [shape = 'u32[]', space=smem, size = 0x4, offset = 0x4, fixed_abs, tag = 'smem constant byte address 0x4 - core index']
  #allocation1 [shape = 'u32[72,128]{1,0:T(1,128)}', space=vmem, size = 0x9000, scoped, tag = 'internal scratch']
  #allocation2 [shape = 'f32[64,64]{1,0:T(8,128)}', space=vmem, size = 0x8000, scoped, tag = 'scratch operand']
  #allocation3 [shape = 'f32[64,64]{1,0:T(8,128)}', space=vmem, size = 0x8000, scoped, tag = 'scratch operand']
  #allocation4 [shape = 'f32[1,64]{1,0:T(1,128)}', space=vmem, size = 0x200, scoped, tag = 'scratch operand']
  %s0 = inlined_call_operand.vmem [shape: f32[2,256,64], index: 0, kind: input, shape index: {}]
  %s1 = inlined_call_operand.vmem [shape: f32[64,64], index: 1, kind: input, shape index: {}]
  %s2 = inlined_call_operand.vmem [shape: f32[64,64], index: 2, kind: input, shape index: {}]
  %s3 = inlined_call_operand.vmem [shape: f32[64,64], index: 3, kind: input, shape index: {}]
  %s4 = inlined_call_operand.vmem [shape: f32[64,64], index: 4, kind: input, shape index: {}]
  %s5 = inlined_call_operand.vmem [shape: f32[1,64], index: 5, kind: input, shape index: {}]
  %s6 = inlined_call_operand.vmem [shape: f32[64,64], index: 6, kind: input, shape index: {}]
  %s7 = inlined_call_operand.vmem [shape: f32[2,256,64], index: 7, kind: output, shape index: {}]
  %s8 = sld [smem:[#allocation0]]
  $region77: #{tpu_custom_call.1} parent=0
    _
  %s10 = ssub.s32 1, %s8
  %s11 = scalar_select 0, %s10, %s8
  loop: start=0, step=1, limit=18
  $region2: #{tpu_custom_call.1} parent=0 // loop_pre_header
    _
  $region3: #{tpu_custom_call.1} parent=0 // loop_header
    %s13 = sphi 0, %s17
    %p14 = scmp.ge.s32.totalorder %s13, 18
    %s20 = sphi 0, %s39
    %s21 = sphi 0, %s35
    %s22 = sphi 0, %s31
    %s23 = sphi 0, %s20
    %s24 = sphi 0, %s21
    %s25 = sphi 0, %s22
    %s26 = sphi 0, %s23
    %s27 = sphi 0, %s24
    %s28 = sphi 0, %s25
    %s44 = sphi 0, %s46
    %s47 = sphi 0, %s44
    %s48 = sphi 0, %s47
    %s64 = sphi 0, %s48
    %s68 = sphi 0, %s68
    %s70 = sphi 0, %s68
    %s71 = sphi 0, %s70
    %s85 = sphi 0, %s71
    %s89 = sphi 0, %s89
    %s91 = sphi 0, %s89
    %s92 = sphi 0, %s91
    %s106 = sphi 0, %s92
    %s110 = sphi 0, %s110
    %s112 = sphi 0, %s110
    %s113 = sphi 0, %s112
    %s127 = sphi 0, %s113
    %s131 = sphi 0, %s131
    %s133 = sphi 0, %s131
    %s134 = sphi 0, %s133
    %s148 = sphi 0, %s134
    %s152 = sphi 0, %s152
    %s154 = sphi 0, %s152
    %s155 = sphi 0, %s154
    %s169 = sphi 0, %s155
    %s173 = sphi 0, %s173
    %s175 = sphi 0, %s173
    %s176 = sphi 0, %s175
    %s190 = sphi 0, %s176
    %s200 = sphi 0, %s202
    %s203 = sphi 0, %s200
    %s204 = sphi 0, %s203
    %s220 = sphi 0, %s204
  $region4: #{tpu_custom_call.1} parent=0 // loop_header_branch
    %16 = sbr.rel (%p14) target = $region8
  $region5: #{tpu_custom_call.1} parent=0 // loop_body
    %s18 = ssub.s32 %s13, 1
    %s19 = ssub.s32 %s13, 2
    %s29 = sadd.s32 1, %s22
    %p30 = scmp.ge.s32.totalorder %s29, 4
    %s31 = scalar_select %p30, 0, %s29
    %s32 = sadd.s32 1, %s21
    %s33 = scalar_select %p30, %s32, %s21
    %p34 = scmp.ge.s32.totalorder %s33, 2
    %s35 = scalar_select %p34, 0, %s33
    %s36 = sadd.s32 1, %s20
    %s37 = scalar_select %p34, %s36, %s20
    %p38 = scmp.ge.s32.totalorder %s37, 2
    %s39 = scalar_select %p38, 0, %s37
    %s40 = ssub.s32 %s20, %s39
    %s41 = ssub.s32 %s22, %s31
    %s42 = sor.u32 %s40, %s41
    %p43 = scmp.eq.s32.totalorder %s42, 0
    %s45 = sadd.s32 %s44, 1
    %s46 = scalar_select %p43, %s44, %s45
    %p49 = pneg %p43
    %p50 = scmp.eq.s32.totalorder %s13, 15
    %p51 = por %p49, %p50
    %p52 = scmp.ne.s32.totalorder %s44, %s47
    %p53 = scmp.eq.s32.totalorder %s13, 0
    %p54 = por %p52, %p53
    %p55 = scmp.ne.s32.totalorder %s44, %s47
    %p56 = scmp.eq.s32.totalorder %s18, 15
    %p57 = por %p55, %p56
    %p58 = scmp.ne.s32.totalorder %s47, %s48
    %p59 = scmp.eq.s32.totalorder %s18, 0
    %p60 = por %p58, %p59
    %p61 = scmp.ne.s32.totalorder %s47, %s48
    %p62 = scmp.eq.s32.totalorder %s19, 15
    %p63 = por %p61, %p62
    %p65 = scmp.ne.s32.totalorder %s48, %s64
    %p66 = scmp.eq.s32.totalorder %s19, 0
    %p67 = por %p65, %p66
    %s69 = sadd.s32 %s68, 1
    %p72 = scmp.eq.s32.totalorder %s13, 15
    %p73 = scmp.ne.s32.totalorder %s68, %s70
    %p74 = scmp.eq.s32.totalorder %s13, 0
    %p75 = por %p73, %p74
    %p76 = scmp.ne.s32.totalorder %s68, %s70
    %p77 = scmp.eq.s32.totalorder %s18, 15
    %p78 = por %p76, %p77
    %p79 = scmp.ne.s32.totalorder %s70, %s71
    %p80 = scmp.eq.s32.totalorder %s18, 0
    %p81 = por %p79, %p80
    %p82 = scmp.ne.s32.totalorder %s70, %s71
    %p83 = scmp.eq.s32.totalorder %s19, 15
    %p84 = por %p82, %p83
    %p86 = scmp.ne.s32.totalorder %s71, %s85
    %p87 = scmp.eq.s32.totalorder %s19, 0
    %p88 = por %p86, %p87
    %s90 = sadd.s32 %s89, 1
    %p93 = scmp.eq.s32.totalorder %s13, 15
    %p94 = scmp.ne.s32.totalorder %s89, %s91
    %p95 = scmp.eq.s32.totalorder %s13, 0
    %p96 = por %p94, %p95
    %p97 = scmp.ne.s32.totalorder %s89, %s91
    %p98 = scmp.eq.s32.totalorder %s18, 15
    %p99 = por %p97, %p98
    %p100 = scmp.ne.s32.totalorder %s91, %s92
    %p101 = scmp.eq.s32.totalorder %s18, 0
    %p102 = por %p100, %p101
    %p103 = scmp.ne.s32.totalorder %s91, %s92
    %p104 = scmp.eq.s32.totalorder %s19, 15
    %p105 = por %p103, %p104
    %p107 = scmp.ne.s32.totalorder %s92, %s106
    %p108 = scmp.eq.s32.totalorder %s19, 0
    %p109 = por %p107, %p108
    %s111 = sadd.s32 %s110, 1
    %p114 = scmp.eq.s32.totalorder %s13, 15
    %p115 = scmp.ne.s32.totalorder %s110, %s112
    %p116 = scmp.eq.s32.totalorder %s13, 0
    %p117 = por %p115, %p116
    %p118 = scmp.ne.s32.totalorder %s110, %s112
    %p119 = scmp.eq.s32.totalorder %s18, 15
    %p120 = por %p118, %p119
    %p121 = scmp.ne.s32.totalorder %s112, %s113
    %p122 = scmp.eq.s32.totalorder %s18, 0
    %p123 = por %p121, %p122
    %p124 = scmp.ne.s32.totalorder %s112, %s113
    %p125 = scmp.eq.s32.totalorder %s19, 15
    %p126 = por %p124, %p125
    %p128 = scmp.ne.s32.totalorder %s113, %s127
    %p129 = scmp.eq.s32.totalorder %s19, 0
    %p130 = por %p128, %p129
    %s132 = sadd.s32 %s131, 1
    %p135 = scmp.eq.s32.totalorder %s13, 15
    %p136 = scmp.ne.s32.totalorder %s131, %s133
    %p137 = scmp.eq.s32.totalorder %s13, 0
    %p138 = por %p136, %p137
    %p139 = scmp.ne.s32.totalorder %s131, %s133
    %p140 = scmp.eq.s32.totalorder %s18, 15
    %p141 = por %p139, %p140
    %p142 = scmp.ne.s32.totalorder %s133, %s134
    %p143 = scmp.eq.s32.totalorder %s18, 0
    %p144 = por %p142, %p143
    %p145 = scmp.ne.s32.totalorder %s133, %s134
    %p146 = scmp.eq.s32.totalorder %s19, 15
    %p147 = por %p145, %p146
    %p149 = scmp.ne.s32.totalorder %s134, %s148
    %p150 = scmp.eq.s32.totalorder %s19, 0
    %p151 = por %p149, %p150
    %s153 = sadd.s32 %s152, 1
    %p156 = scmp.eq.s32.totalorder %s13, 15
    %p157 = scmp.ne.s32.totalorder %s152, %s154
    %p158 = scmp.eq.s32.totalorder %s13, 0
    %p159 = por %p157, %p158
    %p160 = scmp.ne.s32.totalorder %s152, %s154
    %p161 = scmp.eq.s32.totalorder %s18, 15
    %p162 = por %p160, %p161
    %p163 = scmp.ne.s32.totalorder %s154, %s155
    %p164 = scmp.eq.s32.totalorder %s18, 0
    %p165 = por %p163, %p164
    %p166 = scmp.ne.s32.totalorder %s154, %s155
    %p167 = scmp.eq.s32.totalorder %s19, 15
    %p168 = por %p166, %p167
    %p170 = scmp.ne.s32.totalorder %s155, %s169
    %p171 = scmp.eq.s32.totalorder %s19, 0
    %p172 = por %p170, %p171
    %s174 = sadd.s32 %s173, 1
    %p177 = scmp.eq.s32.totalorder %s13, 15
    %p178 = scmp.ne.s32.totalorder %s173, %s175
    %p179 = scmp.eq.s32.totalorder %s13, 0
    %p180 = por %p178, %p179
    %p181 = scmp.ne.s32.totalorder %s173, %s175
    %p182 = scmp.eq.s32.totalorder %s18, 15
    %p183 = por %p181, %p182
    %p184 = scmp.ne.s32.totalorder %s175, %s176
    %p185 = scmp.eq.s32.totalorder %s18, 0
    %p186 = por %p184, %p185
    %p187 = scmp.ne.s32.totalorder %s175, %s176
    %p188 = scmp.eq.s32.totalorder %s19, 15
    %p189 = por %p187, %p188
    %p191 = scmp.ne.s32.totalorder %s176, %s190
    %p192 = scmp.eq.s32.totalorder %s19, 0
    %p193 = por %p191, %p192
    %s194 = smul.u32 %s21, %s22
    %s195 = smul.u32 %s35, %s31
    %s196 = ssub.s32 %s20, %s39
    %s197 = ssub.s32 %s194, %s195
    %s198 = sor.u32 %s196, %s197
    %p199 = scmp.eq.s32.totalorder %s198, 0
    %s201 = sadd.s32 %s200, 1
    %s202 = scalar_select %p199, %s200, %s201
    %p205 = pneg %p199
    %p206 = scmp.eq.s32.totalorder %s13, 15
    %p207 = por %p205, %p206
    %p208 = scmp.ne.s32.totalorder %s200, %s203
    %p209 = scmp.eq.s32.totalorder %s13, 0
    %p210 = por %p208, %p209
    %p211 = scmp.ne.s32.totalorder %s200, %s203
    %p212 = scmp.eq.s32.totalorder %s18, 15
    %p213 = por %p211, %p212
    %p214 = scmp.ne.s32.totalorder %s203, %s204
    %p215 = scmp.eq.s32.totalorder %s18, 0
    %p216 = por %p214, %p215
    %p217 = scmp.ne.s32.totalorder %s203, %s204
    %p218 = scmp.eq.s32.totalorder %s19, 15
    %p219 = por %p217, %p218
    %p221 = scmp.ne.s32.totalorder %s204, %s220
    %p222 = scmp.eq.s32.totalorder %s19, 0
    %p223 = por %p221, %p222
    %p224 = scmp.le.s32.totalorder 1, %s13
    %p225 = scmp.lt.s32.totalorder %s13, 17
    %p226 = pnand %p224, %p225
    %p227 = pneg %p226
    // Predicated region
    $region9: #{tpu_custom_call.1} parent=5 // pred_check
      _
    $region10: #{tpu_custom_call.1} parent=5 // pred_check_branch
      %229 = sbr.rel (%p226) target = $region12
    $region11: #{tpu_custom_call.1} parent=5 // pred_region
      %s230 = ssub.s32 %s13, 1
      // Predicated region
      $region13: #{tpu_custom_call.1} parent=11 // pred_check
        %p231 = pneg %p81
      $region14: #{tpu_custom_call.1} parent=11 // pred_check_branch
        %233 = sbr.rel (%p231) target = $region16
      $region15: #{tpu_custom_call.1} parent=11 // pred_region
        _
      $region16: #{tpu_custom_call.1} parent=11 // pred_fallthru
        _
      // Predicated region
      $region17: #{tpu_custom_call.1} parent=11 // pred_check
        %p234 = pneg %p102
      $region18: #{tpu_custom_call.1} parent=11 // pred_check_branch
        %236 = sbr.rel (%p234) target = $region20
      $region19: #{tpu_custom_call.1} parent=11 // pred_region
        _
      $region20: #{tpu_custom_call.1} parent=11 // pred_fallthru
        _
      // Predicated region
      $region21: #{tpu_custom_call.1} parent=11 // pred_check
        %p237 = pneg %p123
      $region22: #{tpu_custom_call.1} parent=11 // pred_check_branch
        %239 = sbr.rel (%p237) target = $region24
      $region23: #{tpu_custom_call.1} parent=11 // pred_region
        _
      $region24: #{tpu_custom_call.1} parent=11 // pred_fallthru
        _
      // Predicated region
      $region25: #{tpu_custom_call.1} parent=11 // pred_check
        %p240 = pneg %p144
      $region26: #{tpu_custom_call.1} parent=11 // pred_check_branch
        %242 = sbr.rel (%p240) target = $region28
      $region27: #{tpu_custom_call.1} parent=11 // pred_region
        _
      $region28: #{tpu_custom_call.1} parent=11 // pred_fallthru
        _
      // Predicated region
      $region29: #{tpu_custom_call.1} parent=11 // pred_check
        %p243 = pneg %p165
      $region30: #{tpu_custom_call.1} parent=11 // pred_check_branch
        %245 = sbr.rel (%p243) target = $region32
      $region31: #{tpu_custom_call.1} parent=11 // pred_region
        _
      $region32: #{tpu_custom_call.1} parent=11 // pred_fallthru
        _
      // Predicated region
      $region33: #{tpu_custom_call.1} parent=11 // pred_check
        %p246 = pneg %p186
      $region34: #{tpu_custom_call.1} parent=11 // pred_check_branch
        %248 = sbr.rel (%p246) target = $region36
      $region35: #{tpu_custom_call.1} parent=11 // pred_region
        _
      $region36: #{tpu_custom_call.1} parent=11 // pred_fallthru
        _
    $region12: #{tpu_custom_call.1} parent=5 // pred_fallthru
      _
    %p249 = scmp.lt.s32.totalorder %s13, 16
    // Predicated region
    $region37: #{tpu_custom_call.1} parent=5 // pred_check
      %p250 = pneg %p249
    $region38: #{tpu_custom_call.1} parent=5 // pred_check_branch
      %252 = sbr.rel (%p250) target = $region40
    $region39: #{tpu_custom_call.1} parent=5 // pred_region
      // Predicated region
      $region41: #{tpu_custom_call.1} parent=39 // pred_check
        %p253 = pneg %p54
      $region42: #{tpu_custom_call.1} parent=39 // pred_check_branch
        %255 = sbr.rel (%p253) target = $region44
      $region43: #{tpu_custom_call.1} parent=39 // pred_region
        %s256 = smul.u32 8, %s22
        %p257 = scmp.lt.s32.totalorder %s20, 1
        %s258 = scalar_select %p257, %s20, 1
        %p259 = scmp.lt.s32.totalorder %s256, 31
        %s260 = scalar_select %p259, %s256, 31
        %s261 = smul.addr %s258, 32
        %s262 = sadd.s32 %s260, %s261
        %s263 = smul.addr %s262, 8
        %s264 = scalar_lea.vmem %s0, %s263
        %s265 = smul.u32 8, %s22
      $region44: #{tpu_custom_call.1} parent=39 // pred_fallthru
        _
    $region40: #{tpu_custom_call.1} parent=5 // pred_fallthru
      _
    %p266 = scmp.le.s32.totalorder 1, %s13
    %p267 = scmp.lt.s32.totalorder %s13, 17
    %p268 = pnand %p266, %p267
    %p269 = pneg %p268
    // Predicated region
    $region45: #{tpu_custom_call.1} parent=5 // pred_check
      _
    $region46: #{tpu_custom_call.1} parent=5 // pred_check_branch
      %271 = sbr.rel (%p268) target = $region48
    $region47: #{tpu_custom_call.1} parent=5 // pred_region
      %s272 = ssub.s32 %s13, 1
      %s273 = smul.u32 8, %s25
      %p274 = scmp.lt.s32.totalorder %s23, 1
      %s275 = scalar_select %p274, %s23, 1
      %p276 = scmp.lt.s32.totalorder %s273, 31
      %s277 = scalar_select %p276, %s273, 31
      %s278 = smul.addr %s275, 32
      %s279 = sadd.s32 %s277, %s278
      %s280 = smul.addr %s279, 8
      %s281 = scalar_lea.vmem %s0, %s280
      %p282 = pneg %p60
      %p283 = pneg %p57
      %p284 = pneg %p81
      %p285 = pneg %p78
      %p286 = pneg %p102
      %p287 = pneg %p99
      %p288 = pneg %p123
      %p289 = pneg %p120
      %p290 = pneg %p144
      %p291 = pneg %p141
      %p292 = pneg %p165
      %p293 = pneg %p162
      %p294 = pneg %p186
      %p295 = pneg %p183
      %p296 = pneg %p216
      %p297 = pneg %p213
      %s298 = smul.u32 %s24, %s25
      %s299 = smul.u32 8, %s298
      %p300 = scmp.lt.s32.totalorder %s23, 1
      %s301 = scalar_select %p300, %s23, 1
      %p302 = scmp.lt.s32.totalorder %s299, 31
      %s303 = scalar_select %p302, %s299, 31
      %s304 = smul.addr %s301, 32
      %s305 = sadd.s32 %s303, %s304
      %s306 = smul.addr %s305, 8
      %s307 = scalar_lea.vmem %s7, %s306
      %s308 = smul.u32 8, %s25
      %p309 = scmp.lt.s32.totalorder %s23, 1
      %s310 = scalar_select %p309, %s23, 1
      %p311 = scmp.lt.s32.totalorder %s308, 31
      %s312 = scalar_select %p311, %s308, 31
      %s313 = smul.addr %s310, 32
      %s314 = sadd.s32 %s312, %s313
      %s315 = smul.addr %s314, 8
      %s316 = scalar_lea.vmem %s0, %s315
      %s317 = smul.u32 8, %s25
      %s318 = smul.u32 %s24, %s25
      %s319 = smul.u32 8, %s318
      %p320 = scmp.lt.s32.totalorder %s23, 1
      %s321 = scalar_select %p320, %s23, 1
      %p322 = scmp.lt.s32.totalorder %s319, 31
      %s323 = scalar_select %p322, %s319, 31
      %s324 = smul.addr %s321, 32
      %s325 = sadd.s32 %s323, %s324
      %s326 = smul.addr %s325, 8
      %s327 = scalar_lea.vmem %s7, %s326
      %s328 = smul.u32 %s24, %s25
      %s329 = smul.u32 8, %s328
      %v330 = vld [vmem:[%s316] sm:$0xff]
      %v331 = vld [vmem:[%s316 + $0x8] sm:$0xff]
      %v332 = vld [vmem:[%s316 + $0x10] sm:$0xff]
      %v333 = vld [vmem:[%s316 + $0x18] sm:$0xff]
      %v334 = vld [vmem:[%s316 + $0x20] sm:$0xff]
      %v335 = vld [vmem:[%s316 + $0x28] sm:$0xff]
      %v336 = vld [vmem:[%s316 + $0x30] sm:$0xff]
      %v337 = vld [vmem:[%s316 + $0x38] sm:$0xff]
      %p338 = scmp.eq.s32.totalorder %s24, 0
      // Predicated region
      $region49: #{tpu_custom_call.1} parent=47 // pred_check
        %p339 = pneg %p338
      $region50: #{tpu_custom_call.1} parent=47 // pred_check_branch
        %341 = sbr.rel (%p339) target = $region52
      $region51: #{tpu_custom_call.1} parent=47 // pred_region
        %p342 = scmp.eq.s32.totalorder %s25, 0
        // Predicated region
        $region53: #{tpu_custom_call.1} parent=51 // pred_check
          %p343 = pneg %p342
        $region54: #{tpu_custom_call.1} parent=51 // pred_check_branch
          %345 = sbr.rel (%p343) target = $region56
        $region55: #{tpu_custom_call.1} parent=51 // pred_region
          %vm346 = vcmask 523264
          %347 = vst.msk [vmem:[#allocation2] sm:$0xff] %vm346, 0.0
          %348 = vst.msk [vmem:[#allocation2 + $0x8] sm:$0xff] %vm346, 0.0
          %349 = vst.msk [vmem:[#allocation2 + $0x10] sm:$0xff] %vm346, 0.0
          %350 = vst.msk [vmem:[#allocation2 + $0x18] sm:$0xff] %vm346, 0.0
          %351 = vst.msk [vmem:[#allocation2 + $0x20] sm:$0xff] %vm346, 0.0
          %352 = vst.msk [vmem:[#allocation2 + $0x28] sm:$0xff] %vm346, 0.0
          %353 = vst.msk [vmem:[#allocation2 + $0x30] sm:$0xff] %vm346, 0.0
          %354 = vst.msk [vmem:[#allocation2 + $0x38] sm:$0xff] %vm346, 0.0
        $region56: #{tpu_custom_call.1} parent=51 // pred_fallthru
          _
        %v355 = vld [vmem:[#allocation2] sm:$0xff]
        %v356 = vld [vmem:[#allocation2 + $0x8] sm:$0xff]
        %v357 = vld [vmem:[#allocation2 + $0x10] sm:$0xff]
        %v358 = vld [vmem:[#allocation2 + $0x18] sm:$0xff]
        %v359 = vld [vmem:[#allocation2 + $0x20] sm:$0xff]
        %v360 = vld [vmem:[#allocation2 + $0x28] sm:$0xff]
        %v361 = vld [vmem:[#allocation2 + $0x30] sm:$0xff]
        %v362 = vld [vmem:[#allocation2 + $0x38] sm:$0xff]
        %363 = vxpose.xlu0.b32.start [1/16] %v330, 128
        %364 = vxpose.xlu0.b32.cont [2/16] %v331, 128
        %365 = vxpose.xlu0.b32.cont [3/16] %v332, 128
        %366 = vxpose.xlu0.b32.cont [4/16] %v333, 128
        %367 = vxpose.xlu0.b32.cont [5/16] %v334, 128
        %368 = vxpose.xlu0.b32.cont [6/16] %v335, 128
        %369 = vxpose.xlu0.b32.cont [7/16] %v336, 128
        %370 = vxpose.xlu0.b32.cont [8/16] %v337, 128
        %371 = vxpose.xlu0.b32.cont [9/16] 0.0, 128
        %372 = vxpose.xlu0.b32.cont [10/16] 0.0, 128
        %373 = vxpose.xlu0.b32.cont [11/16] 0.0, 128
        %374 = vxpose.xlu0.b32.cont [12/16] 0.0, 128
        %375 = vxpose.xlu0.b32.cont [13/16] 0.0, 128
        %376 = vxpose.xlu0.b32.cont [14/16] 0.0, 128
        %377 = vxpose.xlu0.b32.cont [15/16] 0.0, 128
        %378 = vxpose.xlu0.b32.end [16/16] 0.0, 128
        %v379 = vpop.trf.xlu0
        %v380 = vpop.trf.xlu0
        %v381 = vpop.trf.xlu0
        %v382 = vpop.trf.xlu0
        %v383 = vpop.trf.xlu0
        %v384 = vpop.trf.xlu0
        %v385 = vpop.trf.xlu0
        %v386 = vpop.trf.xlu0
        %v387 = vpop.trf.xlu0
        %v388 = vpop.trf.xlu0
        %v389 = vpop.trf.xlu0
        %v390 = vpop.trf.xlu0
        %v391 = vpop.trf.xlu0
        %v392 = vpop.trf.xlu0
        %v393 = vpop.trf.xlu0
        %v394 = vpop.trf.xlu0
        %vm395 = vcmask 523264
        %v397 = vsel %vm395, %v379, 0
        %v400 = vsel %vm395, %v380, 0
        %v403 = vsel %vm395, %v381, 0
        %v406 = vsel %vm395, %v382, 0
        %v409 = vsel %vm395, %v383, 0
        %v412 = vsel %vm395, %v384, 0
        %v415 = vsel %vm395, %v385, 0
        %v418 = vsel %vm395, %v386, 0
        %420 = vmatpush.msra.mxu0 0.0
        %421 = vmatpush.msra.mxu0 0.0
        %422 = vmatpush.msra.mxu0 0.0
        %423 = vmatpush.msra.mxu0 0.0
        %424 = vmatpush.msra.mxu0 0.0
        %425 = vmatpush.msra.mxu0 0.0
        %426 = vmatpush.msra.mxu0 0.0
        %427 = vmatpush.msra.mxu0 0.0
        %428 = vmatpush.msra.mxu0 %v337
        %429 = vmatpush.msra.mxu0 %v336
        %430 = vmatpush.msra.mxu0 %v335
        %431 = vmatpush.msra.mxu0 %v334
        %432 = vmatpush.msra.mxu0 %v333
        %433 = vmatpush.msra.mxu0 %v332
        %434 = vmatpush.msra.mxu0 %v331
        %435 = vmatpush.msra.mxu0 %v330
        %436 = vmatmul.f32.gmra.mxu0 %v397
        %v437 = vpop.f32.mrf.mxu0
        %v438 = vadd.f32 0.0, %v437
        %439 = vmatmul.f32.gmra.mxu0 %v400
        %v440 = vpop.f32.mrf.mxu0
        %v441 = vadd.f32 0.0, %v440
        %442 = vmatmul.f32.gmra.mxu0 %v403
        %v443 = vpop.f32.mrf.mxu0
        %v444 = vadd.f32 0.0, %v443
        %445 = vmatmul.f32.gmra.mxu0 %v406
        %v446 = vpop.f32.mrf.mxu0
        %v447 = vadd.f32 0.0, %v446
        %448 = vmatmul.f32.gmra.mxu0 %v409
        %v449 = vpop.f32.mrf.mxu0
        %v450 = vadd.f32 0.0, %v449
        %451 = vmatmul.f32.gmra.mxu0 %v412
        %v452 = vpop.f32.mrf.mxu0
        %v453 = vadd.f32 0.0, %v452
        %454 = vmatmul.f32.gmra.mxu0 %v415
        %v455 = vpop.f32.mrf.mxu0
        %v456 = vadd.f32 0.0, %v455
        %457 = vmatmul.f32.gmra.mxu0 %v418
        %v458 = vpop.f32.mrf.mxu0
        %v459 = vadd.f32 0.0, %v458
        %460 = vdwg.mxu0
        %v461 = vadd.f32 %v355, %v438
        %v462 = vadd.f32 %v356, %v441
        %v463 = vadd.f32 %v357, %v444
        %v464 = vadd.f32 %v358, %v447
        %v465 = vadd.f32 %v359, %v450
        %v466 = vadd.f32 %v360, %v453
        %v467 = vadd.f32 %v361, %v456
        %v468 = vadd.f32 %v362, %v459
        %469 = vst.msk [vmem:[#allocation2] sm:$0xff] %vm395, %v461
        %470 = vst.msk [vmem:[#allocation2 + $0x8] sm:$0xff] %vm395, %v462
        %471 = vst.msk [vmem:[#allocation2 + $0x10] sm:$0xff] %vm395, %v463
        %472 = vst.msk [vmem:[#allocation2 + $0x18] sm:$0xff] %vm395, %v464
        %473 = vst.msk [vmem:[#allocation2 + $0x20] sm:$0xff] %vm395, %v465
        %474 = vst.msk [vmem:[#allocation2 + $0x28] sm:$0xff] %vm395, %v466
        %475 = vst.msk [vmem:[#allocation2 + $0x30] sm:$0xff] %vm395, %v467
        %476 = vst.msk [vmem:[#allocation2 + $0x38] sm:$0xff] %vm395, %v468
        %p477 = scmp.eq.s32.totalorder %s25, 3
        // Predicated region
        $region57: #{tpu_custom_call.1} parent=51 // pred_check
          %p478 = pneg %p477
        $region58: #{tpu_custom_call.1} parent=51 // pred_check_branch
          %480 = sbr.rel (%p478) target = $region60
        $region59: #{tpu_custom_call.1} parent=51 // pred_region
          %v481 = vld [vmem:[%s1] sm:$0xff]
          %v482 = vld [vmem:[%s1 + $0x8] sm:$0xff]
          %v483 = vld [vmem:[%s1 + $0x10] sm:$0xff]
          %v484 = vld [vmem:[%s1 + $0x18] sm:$0xff]
          %v485 = vld [vmem:[%s1 + $0x20] sm:$0xff]
          %v486 = vld [vmem:[%s1 + $0x28] sm:$0xff]
          %v487 = vld [vmem:[%s1 + $0x30] sm:$0xff]
          %v488 = vld [vmem:[%s1 + $0x38] sm:$0xff]
          %v489 = vld [vmem:[%s2] sm:$0xff]
          %v490 = vld [vmem:[%s2 + $0x8] sm:$0xff]
          %v491 = vld [vmem:[%s2 + $0x10] sm:$0xff]
          %v492 = vld [vmem:[%s2 + $0x18] sm:$0xff]
          %v493 = vld [vmem:[%s2 + $0x20] sm:$0xff]
          %v494 = vld [vmem:[%s2 + $0x28] sm:$0xff]
          %v495 = vld [vmem:[%s2 + $0x30] sm:$0xff]
          %v496 = vld [vmem:[%s2 + $0x38] sm:$0xff]
          %v497 = vld [vmem:[%s3] sm:$0xff]
          %v498 = vld [vmem:[%s3 + $0x8] sm:$0xff]
          %v499 = vld [vmem:[%s3 + $0x10] sm:$0xff]
          %v500 = vld [vmem:[%s3 + $0x18] sm:$0xff]
          %v501 = vld [vmem:[%s3 + $0x20] sm:$0xff]
          %v502 = vld [vmem:[%s3 + $0x28] sm:$0xff]
          %v503 = vld [vmem:[%s3 + $0x30] sm:$0xff]
          %v504 = vld [vmem:[%s3 + $0x38] sm:$0xff]
          %v505 = vld [vmem:[%s4] sm:$0xff]
          %v506 = vld [vmem:[%s4 + $0x8] sm:$0xff]
          %v507 = vld [vmem:[%s4 + $0x10] sm:$0xff]
          %v508 = vld [vmem:[%s4 + $0x18] sm:$0xff]
          %v509 = vld [vmem:[%s4 + $0x20] sm:$0xff]
          %v510 = vld [vmem:[%s4 + $0x28] sm:$0xff]
          %v511 = vld [vmem:[%s4 + $0x30] sm:$0xff]
          %v512 = vld [vmem:[%s4 + $0x38] sm:$0xff]
          %v513 = vld [vmem:[#allocation2] sm:$0xff]
          %v514 = vld [vmem:[#allocation2 + $0x8] sm:$0xff]
          %v515 = vld [vmem:[#allocation2 + $0x10] sm:$0xff]
          %v516 = vld [vmem:[#allocation2 + $0x18] sm:$0xff]
          %v517 = vld [vmem:[#allocation2 + $0x20] sm:$0xff]
          %v518 = vld [vmem:[#allocation2 + $0x28] sm:$0xff]
          %v519 = vld [vmem:[#allocation2 + $0x30] sm:$0xff]
          %v520 = vld [vmem:[#allocation2 + $0x38] sm:$0xff]
          %521 = vxpose.xlu0.b32.start [1/16] %v481, 128
          %522 = vxpose.xlu0.b32.cont [2/16] %v482, 128
          %523 = vxpose.xlu0.b32.cont [3/16] %v483, 128
          %524 = vxpose.xlu0.b32.cont [4/16] %v484, 128
          %525 = vxpose.xlu0.b32.cont [5/16] %v485, 128
          %526 = vxpose.xlu0.b32.cont [6/16] %v486, 128
          %527 = vxpose.xlu0.b32.cont [7/16] %v487, 128
          %528 = vxpose.xlu0.b32.cont [8/16] %v488, 128
          %529 = vxpose.xlu0.b32.cont [9/16] 0.0, 128
          %530 = vxpose.xlu0.b32.cont [10/16] 0.0, 128
          %531 = vxpose.xlu0.b32.cont [11/16] 0.0, 128
          %532 = vxpose.xlu0.b32.cont [12/16] 0.0, 128
          %533 = vxpose.xlu0.b32.cont [13/16] 0.0, 128
          %534 = vxpose.xlu0.b32.cont [14/16] 0.0, 128
          %535 = vxpose.xlu0.b32.cont [15/16] 0.0, 128
          %536 = vxpose.xlu0.b32.end [16/16] 0.0, 128
          %v537 = vpop.trf.xlu0
          %v538 = vpop.trf.xlu0
          %v539 = vpop.trf.xlu0
          %v540 = vpop.trf.xlu0
          %v541 = vpop.trf.xlu0
          %v542 = vpop.trf.xlu0
          %v543 = vpop.trf.xlu0
          %v544 = vpop.trf.xlu0
          %v545 = vpop.trf.xlu0
          %v546 = vpop.trf.xlu0
          %v547 = vpop.trf.xlu0
          %v548 = vpop.trf.xlu0
          %v549 = vpop.trf.xlu0
          %v550 = vpop.trf.xlu0
          %v551 = vpop.trf.xlu0
          %v552 = vpop.trf.xlu0
          %v554 = vsel %vm395, %v537, 0
          %v557 = vsel %vm395, %v538, 0
          %v560 = vsel %vm395, %v539, 0
          %v563 = vsel %vm395, %v540, 0
          %v566 = vsel %vm395, %v541, 0
          %v569 = vsel %vm395, %v542, 0
          %v572 = vsel %vm395, %v543, 0
          %v575 = vsel %vm395, %v544, 0
          %577 = vmatpush.msra.mxu0 0.0
          %578 = vmatpush.msra.mxu0 0.0
          %579 = vmatpush.msra.mxu0 0.0
          %580 = vmatpush.msra.mxu0 0.0
          %581 = vmatpush.msra.mxu0 0.0
          %582 = vmatpush.msra.mxu0 0.0
          %583 = vmatpush.msra.mxu0 0.0
          %584 = vmatpush.msra.mxu0 0.0
          %585 = vmatpush.msra.mxu0 %v520
          %586 = vmatpush.msra.mxu0 %v519
          %587 = vmatpush.msra.mxu0 %v518
          %588 = vmatpush.msra.mxu0 %v517
          %589 = vmatpush.msra.mxu0 %v516
          %590 = vmatpush.msra.mxu0 %v515
          %591 = vmatpush.msra.mxu0 %v514
          %592 = vmatpush.msra.mxu0 %v513
          %593 = vmatmul.f32.gmra.mxu0 %v554
          %v594 = vpop.f32.mrf.mxu0
          %v595 = vadd.f32 0.0, %v594
          %596 = vmatmul.f32.gmra.mxu0 %v557
          %v597 = vpop.f32.mrf.mxu0
          %v598 = vadd.f32 0.0, %v597
          %599 = vmatmul.f32.gmra.mxu0 %v560
          %v600 = vpop.f32.mrf.mxu0
          %v601 = vadd.f32 0.0, %v600
          %602 = vmatmul.f32.gmra.mxu0 %v563
          %v603 = vpop.f32.mrf.mxu0
          %v604 = vadd.f32 0.0, %v603
          %605 = vmatmul.f32.gmra.mxu0 %v566
          %v606 = vpop.f32.mrf.mxu0
          %v607 = vadd.f32 0.0, %v606
          %608 = vmatmul.f32.gmra.mxu0 %v569
          %v609 = vpop.f32.mrf.mxu0
          %v610 = vadd.f32 0.0, %v609
          %611 = vmatmul.f32.gmra.mxu0 %v572
          %v612 = vpop.f32.mrf.mxu0
          %v613 = vadd.f32 0.0, %v612
          %614 = vmatmul.f32.gmra.mxu0 %v575
          %v615 = vpop.f32.mrf.mxu0
          %v616 = vadd.f32 0.0, %v615
          %617 = vdwg.mxu0
          %v618 = vld [vmem:[%s6] sm:$0xff]
          %v619 = vld [vmem:[%s6 + $0x8] sm:$0xff]
          %v620 = vld [vmem:[%s6 + $0x10] sm:$0xff]
          %v621 = vld [vmem:[%s6 + $0x18] sm:$0xff]
          %v622 = vld [vmem:[%s6 + $0x20] sm:$0xff]
          %v623 = vld [vmem:[%s6 + $0x28] sm:$0xff]
          %v624 = vld [vmem:[%s6 + $0x30] sm:$0xff]
          %v625 = vld [vmem:[%s6 + $0x38] sm:$0xff]
          %v627 = vsel %vm395, %v595, 0
          %v630 = vsel %vm395, %v598, 0
          %v633 = vsel %vm395, %v601, 0
          %v636 = vsel %vm395, %v604, 0
          %v639 = vsel %vm395, %v607, 0
          %v642 = vsel %vm395, %v610, 0
          %v645 = vsel %vm395, %v613, 0
          %v648 = vsel %vm395, %v616, 0
          %650 = vmatpush.msra.mxu0 0.0
          %651 = vmatpush.msra.mxu0 0.0
          %652 = vmatpush.msra.mxu0 0.0
          %653 = vmatpush.msra.mxu0 0.0
          %654 = vmatpush.msra.mxu0 0.0
          %655 = vmatpush.msra.mxu0 0.0
          %656 = vmatpush.msra.mxu0 0.0
          %657 = vmatpush.msra.mxu0 0.0
          %658 = vmatpush.msra.mxu0 %v496
          %659 = vmatpush.msra.mxu0 %v495
          %660 = vmatpush.msra.mxu0 %v494
          %661 = vmatpush.msra.mxu0 %v493
          %662 = vmatpush.msra.mxu0 %v492
          %663 = vmatpush.msra.mxu0 %v491
          %664 = vmatpush.msra.mxu0 %v490
          %665 = vmatpush.msra.mxu0 %v489
          %666 = vmatmul.f32.gmra.mxu0 %v627
          %v667 = vpop.f32.mrf.mxu0
          %v668 = vadd.f32 %v618, %v667
          %669 = vmatmul.f32.gmra.mxu0 %v630
          %v670 = vpop.f32.mrf.mxu0
          %v671 = vadd.f32 %v619, %v670
          %672 = vmatmul.f32.gmra.mxu0 %v633
          %v673 = vpop.f32.mrf.mxu0
          %v674 = vadd.f32 %v620, %v673
          %675 = vmatmul.f32.gmra.mxu0 %v636
          %v676 = vpop.f32.mrf.mxu0
          %v677 = vadd.f32 %v621, %v676
          %678 = vmatmul.f32.gmra.mxu0 %v639
          %v679 = vpop.f32.mrf.mxu0
          %v680 = vadd.f32 %v622, %v679
          %681 = vmatmul.f32.gmra.mxu0 %v642
          %v682 = vpop.f32.mrf.mxu0
          %v683 = vadd.f32 %v623, %v682
          %684 = vmatmul.f32.gmra.mxu0 %v645
          %v685 = vpop.f32.mrf.mxu0
          %v686 = vadd.f32 %v624, %v685
          %687 = vmatmul.f32.gmra.mxu0 %v648
          %v688 = vpop.f32.mrf.mxu0
          %v689 = vadd.f32 %v625, %v688
          %690 = vdwg.mxu0
          %v691 = vsel %vm395, %v668, -inf
          %692 = vmax.xlane.f32.xlu0 %v691
          %v693 = vpop.xlane.xlu0 %692
          %v694 = vsel %vm395, %v671, -inf
          %695 = vmax.xlane.f32.xlu0 %v694
          %v696 = vpop.xlane.xlu0 %695
          %v697 = vsel %vm395, %v674, -inf
          %698 = vmax.xlane.f32.xlu0 %v697
          %v699 = vpop.xlane.xlu0 %698
          %v700 = vsel %vm395, %v677, -inf
          %701 = vmax.xlane.f32.xlu0 %v700
          %v702 = vpop.xlane.xlu0 %701
          %v703 = vsel %vm395, %v680, -inf
          %704 = vmax.xlane.f32.xlu0 %v703
          %v705 = vpop.xlane.xlu0 %704
          %v706 = vsel %vm395, %v683, -inf
          %707 = vmax.xlane.f32.xlu0 %v706
          %v708 = vpop.xlane.xlu0 %707
          %v709 = vsel %vm395, %v686, -inf
          %710 = vmax.xlane.f32.xlu0 %v709
          %v711 = vpop.xlane.xlu0 %710
          %v712 = vsel %vm395, %v689, -inf
          %713 = vmax.xlane.f32.xlu0 %v712
          %v714 = vpop.xlane.xlu0 %713
          %v715 = vsub.f32 %v668, %v693
          %v716 = vsub.f32 %v671, %v696
          %v717 = vsub.f32 %v674, %v699
          %v718 = vsub.f32 %v677, %v702
          %v719 = vsub.f32 %v680, %v705
          %v720 = vsub.f32 %v683, %v708
          %v721 = vsub.f32 %v686, %v711
          %v722 = vsub.f32 %v689, %v714
          %v723 = vmul.f32 %v715, 1.442695
          %v724 = vpow.pop %v723
          %v725 = vmul.f32 %v716, 1.442695
          %v726 = vpow.pop %v725
          %v727 = vmul.f32 %v717, 1.442695
          %v728 = vpow.pop %v727
          %v729 = vmul.f32 %v718, 1.442695
          %v730 = vpow.pop %v729
          %v731 = vmul.f32 %v719, 1.442695
          %v732 = vpow.pop %v731
          %v733 = vmul.f32 %v720, 1.442695
          %v734 = vpow.pop %v733
          %v735 = vmul.f32 %v721, 1.442695
          %v736 = vpow.pop %v735
          %v737 = vmul.f32 %v722, 1.442695
          %v738 = vpow.pop %v737
          %v739 = vsel %vm395, %v724, 0.0
          %740 = vadd.xlane.f32.xlu0 %v739
          %v741 = vpop.xlane.xlu0 %740
          %v742 = vsel %vm395, %v726, 0.0
          %743 = vadd.xlane.f32.xlu0 %v742
          %v744 = vpop.xlane.xlu0 %743
          %v745 = vsel %vm395, %v728, 0.0
          %746 = vadd.xlane.f32.xlu0 %v745
          %v747 = vpop.xlane.xlu0 %746
          %v748 = vsel %vm395, %v730, 0.0
          %749 = vadd.xlane.f32.xlu0 %v748
          %v750 = vpop.xlane.xlu0 %749
          %v751 = vsel %vm395, %v732, 0.0
          %752 = vadd.xlane.f32.xlu0 %v751
          %v753 = vpop.xlane.xlu0 %752
          %v754 = vsel %vm395, %v734, 0.0
          %755 = vadd.xlane.f32.xlu0 %v754
          %v756 = vpop.xlane.xlu0 %755
          %v757 = vsel %vm395, %v736, 0.0
          %758 = vadd.xlane.f32.xlu0 %v757
          %v759 = vpop.xlane.xlu0 %758
          %v760 = vsel %vm395, %v738, 0.0
          %761 = vadd.xlane.f32.xlu0 %v760
          %v762 = vpop.xlane.xlu0 %761
          %v763 = vrcp.pop %v741
          %v764 = vmul.f32 %v741, %v763
          %v765 = vsub.f32 1.0, %v764
          %v766 = vmul.f32 %v763, %v765
          %v767 = vadd.f32 %v763, %v766
          %vm768 = vweird.f32 %v741
          %vm769 = vweird.f32 %v763
          %vm770 = vmor %vm768, %vm769
          %v771 = vsel %vm770, %v763, %v767
          %v772 = vand.u32 2147483647, %v741
          %vm773 = vcmp.eq.f32.partialorder %v772, 8.507059e+37
          %v774 = vand.u32 %v741, 2147483648
          %v775 = vor.u32 1.1754944e-38, %v774
          %v776 = vsel %vm773, %v775, %v771
          %v777 = vmul.f32 %v724, %v776
          %v778 = vrcp.pop %v744
          %v779 = vmul.f32 %v744, %v778
          %v780 = vsub.f32 1.0, %v779
          %v781 = vmul.f32 %v778, %v780
          %v782 = vadd.f32 %v778, %v781
          %vm783 = vweird.f32 %v744
          %vm784 = vweird.f32 %v778
          %vm785 = vmor %vm783, %vm784
          %v786 = vsel %vm785, %v778, %v782
          %v787 = vand.u32 2147483647, %v744
          %vm788 = vcmp.eq.f32.partialorder %v787, 8.507059e+37
          %v789 = vand.u32 %v744, 2147483648
          %v790 = vor.u32 1.1754944e-38, %v789
          %v791 = vsel %vm788, %v790, %v786
          %v792 = vmul.f32 %v726, %v791
          %v793 = vrcp.pop %v747
          %v794 = vmul.f32 %v747, %v793
          %v795 = vsub.f32 1.0, %v794
          %v796 = vmul.f32 %v793, %v795
          %v797 = vadd.f32 %v793, %v796
          %vm798 = vweird.f32 %v747
          %vm799 = vweird.f32 %v793
          %vm800 = vmor %vm798, %vm799
          %v801 = vsel %vm800, %v793, %v797
          %v802 = vand.u32 2147483647, %v747
          %vm803 = vcmp.eq.f32.partialorder %v802, 8.507059e+37
          %v804 = vand.u32 %v747, 2147483648
          %v805 = vor.u32 1.1754944e-38, %v804
          %v806 = vsel %vm803, %v805, %v801
          %v807 = vmul.f32 %v728, %v806
          %v808 = vrcp.pop %v750
          %v809 = vmul.f32 %v750, %v808
          %v810 = vsub.f32 1.0, %v809
          %v811 = vmul.f32 %v808, %v810
          %v812 = vadd.f32 %v808, %v811
          %vm813 = vweird.f32 %v750
          %vm814 = vweird.f32 %v808
          %vm815 = vmor %vm813, %vm814
          %v816 = vsel %vm815, %v808, %v812
          %v817 = vand.u32 2147483647, %v750
          %vm818 = vcmp.eq.f32.partialorder %v817, 8.507059e+37
          %v819 = vand.u32 %v750, 2147483648
          %v820 = vor.u32 1.1754944e-38, %v819
          %v821 = vsel %vm818, %v820, %v816
          %v822 = vmul.f32 %v730, %v821
          %v823 = vrcp.pop %v753
          %v824 = vmul.f32 %v753, %v823
          %v825 = vsub.f32 1.0, %v824
          %v826 = vmul.f32 %v823, %v825
          %v827 = vadd.f32 %v823, %v826
          %vm828 = vweird.f32 %v753
          %vm829 = vweird.f32 %v823
          %vm830 = vmor %vm828, %vm829
          %v831 = vsel %vm830, %v823, %v827
          %v832 = vand.u32 2147483647, %v753
          %vm833 = vcmp.eq.f32.partialorder %v832, 8.507059e+37
          %v834 = vand.u32 %v753, 2147483648
          %v835 = vor.u32 1.1754944e-38, %v834
          %v836 = vsel %vm833, %v835, %v831
          %v837 = vmul.f32 %v732, %v836
          %v838 = vrcp.pop %v756
          %v839 = vmul.f32 %v756, %v838
          %v840 = vsub.f32 1.0, %v839
          %v841 = vmul.f32 %v838, %v840
          %v842 = vadd.f32 %v838, %v841
          %vm843 = vweird.f32 %v756
          %vm844 = vweird.f32 %v838
          %vm845 = vmor %vm843, %vm844
          %v846 = vsel %vm845, %v838, %v842
          %v847 = vand.u32 2147483647, %v756
          %vm848 = vcmp.eq.f32.partialorder %v847, 8.507059e+37
          %v849 = vand.u32 %v756, 2147483648
          %v850 = vor.u32 1.1754944e-38, %v849
          %v851 = vsel %vm848, %v850, %v846
          %v852 = vmul.f32 %v734, %v851
          %v853 = vrcp.pop %v759
          %v854 = vmul.f32 %v759, %v853
          %v855 = vsub.f32 1.0, %v854
          %v856 = vmul.f32 %v853, %v855
          %v857 = vadd.f32 %v853, %v856
          %vm858 = vweird.f32 %v759
          %vm859 = vweird.f32 %v853
          %vm860 = vmor %vm858, %vm859
          %v861 = vsel %vm860, %v853, %v857
          %v862 = vand.u32 2147483647, %v759
          %vm863 = vcmp.eq.f32.partialorder %v862, 8.507059e+37
          %v864 = vand.u32 %v759, 2147483648
          %v865 = vor.u32 1.1754944e-38, %v864
          %v866 = vsel %vm863, %v865, %v861
          %v867 = vmul.f32 %v736, %v866
          %v868 = vrcp.pop %v762
          %v869 = vmul.f32 %v762, %v868
          %v870 = vsub.f32 1.0, %v869
          %v871 = vmul.f32 %v868, %v870
          %v872 = vadd.f32 %v868, %v871
          %vm873 = vweird.f32 %v762
          %vm874 = vweird.f32 %v868
          %vm875 = vmor %vm873, %vm874
          %v876 = vsel %vm875, %v868, %v872
          %v877 = vand.u32 2147483647, %v762
          %vm878 = vcmp.eq.f32.partialorder %v877, 8.507059e+37
          %v879 = vand.u32 %v762, 2147483648
          %v880 = vor.u32 1.1754944e-38, %v879
          %v881 = vsel %vm878, %v880, %v876
          %v882 = vmul.f32 %v738, %v881
          %v884 = vsel %vm395, %v497, 0
          %v887 = vsel %vm395, %v498, 0
          %v890 = vsel %vm395, %v499, 0
          %v893 = vsel %vm395, %v500, 0
          %v896 = vsel %vm395, %v501, 0
          %v899 = vsel %vm395, %v502, 0
          %v902 = vsel %vm395, %v503, 0
          %v905 = vsel %vm395, %v504, 0
          %v908 = vsel %vm395, %v777, 0
          %v911 = vsel %vm395, %v792, 0
          %v914 = vsel %vm395, %v807, 0
          %v917 = vsel %vm395, %v822, 0
          %v920 = vsel %vm395, %v837, 0
          %v923 = vsel %vm395, %v852, 0
          %v926 = vsel %vm395, %v867, 0
          %v929 = vsel %vm395, %v882, 0
          %931 = vmatpush.xpose.msra.mxu0 0.0
          %932 = vmatpush.xpose.msra.mxu0 0.0
          %933 = vmatpush.xpose.msra.mxu0 0.0
          %934 = vmatpush.xpose.msra.mxu0 0.0
          %935 = vmatpush.xpose.msra.mxu0 0.0
          %936 = vmatpush.xpose.msra.mxu0 0.0
          %937 = vmatpush.xpose.msra.mxu0 0.0
          %938 = vmatpush.xpose.msra.mxu0 0.0
          %939 = vmatpush.xpose.msra.mxu0 %v929
          %940 = vmatpush.xpose.msra.mxu0 %v926
          %941 = vmatpush.xpose.msra.mxu0 %v923
          %942 = vmatpush.xpose.msra.mxu0 %v920
          %943 = vmatpush.xpose.msra.mxu0 %v917
          %944 = vmatpush.xpose.msra.mxu0 %v914
          %945 = vmatpush.xpose.msra.mxu0 %v911
          %946 = vmatpush.xpose.msra.mxu0 %v908
          %947 = vmatmul.f32.gmra.mxu0 %v884
          %v948 = vpop.f32.mrf.mxu0
          %v949 = vadd.f32 0.0, %v948
          %950 = vmatmul.f32.gmra.mxu0 %v887
          %v951 = vpop.f32.mrf.mxu0
          %v952 = vadd.f32 0.0, %v951
          %953 = vmatmul.f32.gmra.mxu0 %v890
          %v954 = vpop.f32.mrf.mxu0
          %v955 = vadd.f32 0.0, %v954
          %956 = vmatmul.f32.gmra.mxu0 %v893
          %v957 = vpop.f32.mrf.mxu0
          %v958 = vadd.f32 0.0, %v957
          %959 = vmatmul.f32.gmra.mxu0 %v896
          %v960 = vpop.f32.mrf.mxu0
          %v961 = vadd.f32 0.0, %v960
          %962 = vmatmul.f32.gmra.mxu0 %v899
          %v963 = vpop.f32.mrf.mxu0
          %v964 = vadd.f32 0.0, %v963
          %965 = vmatmul.f32.gmra.mxu0 %v902
          %v966 = vpop.f32.mrf.mxu0
          %v967 = vadd.f32 0.0, %v966
          %968 = vmatmul.f32.gmra.mxu0 %v905
          %v969 = vpop.f32.mrf.mxu0
          %v970 = vadd.f32 0.0, %v969
          %971 = vdwg.mxu0
          %v973 = vsel %vm395, %v949, 0
          %v976 = vsel %vm395, %v952, 0
          %v979 = vsel %vm395, %v955, 0
          %v982 = vsel %vm395, %v958, 0
          %v985 = vsel %vm395, %v961, 0
          %v988 = vsel %vm395, %v964, 0
          %v991 = vsel %vm395, %v967, 0
          %v994 = vsel %vm395, %v970, 0
          %996 = vmatpush.msra.mxu0 0.0
          %997 = vmatpush.msra.mxu0 0.0
          %998 = vmatpush.msra.mxu0 0.0
          %999 = vmatpush.msra.mxu0 0.0
          %1000 = vmatpush.msra.mxu0 0.0
          %1001 = vmatpush.msra.mxu0 0.0
          %1002 = vmatpush.msra.mxu0 0.0
          %1003 = vmatpush.msra.mxu0 0.0
          %1004 = vmatpush.msra.mxu0 %v512
          %1005 = vmatpush.msra.mxu0 %v511
          %1006 = vmatpush.msra.mxu0 %v510
          %1007 = vmatpush.msra.mxu0 %v509
          %1008 = vmatpush.msra.mxu0 %v508
          %1009 = vmatpush.msra.mxu0 %v507
          %1010 = vmatpush.msra.mxu0 %v506
          %1011 = vmatpush.msra.mxu0 %v505
          %1012 = vmatmul.f32.gmra.mxu0 %v973
          %v1013 = vpop.f32.mrf.mxu0
          %v1014 = vadd.f32 0.0, %v1013
          %1015 = vmatmul.f32.gmra.mxu0 %v976
          %v1016 = vpop.f32.mrf.mxu0
          %v1017 = vadd.f32 0.0, %v1016
          %1018 = vmatmul.f32.gmra.mxu0 %v979
          %v1019 = vpop.f32.mrf.mxu0
          %v1020 = vadd.f32 0.0, %v1019
          %1021 = vmatmul.f32.gmra.mxu0 %v982
          %v1022 = vpop.f32.mrf.mxu0
          %v1023 = vadd.f32 0.0, %v1022
          %1024 = vmatmul.f32.gmra.mxu0 %v985
          %v1025 = vpop.f32.mrf.mxu0
          %v1026 = vadd.f32 0.0, %v1025
          %1027 = vmatmul.f32.gmra.mxu0 %v988
          %v1028 = vpop.f32.mrf.mxu0
          %v1029 = vadd.f32 0.0, %v1028
          %1030 = vmatmul.f32.gmra.mxu0 %v991
          %v1031 = vpop.f32.mrf.mxu0
          %v1032 = vadd.f32 0.0, %v1031
          %1033 = vmatmul.f32.gmra.mxu0 %v994
          %v1034 = vpop.f32.mrf.mxu0
          %v1035 = vadd.f32 0.0, %v1034
          %1036 = vdwg.mxu0
          %v1037 = vld [vmem:[%s5] sm:$0x1]
          %1038 = vst.msk [vmem:[#allocation3] sm:$0xff] %vm395, %v1014
          %1039 = vst.msk [vmem:[#allocation3 + $0x8] sm:$0xff] %vm395, %v1017
          %1040 = vst.msk [vmem:[#allocation3 + $0x10] sm:$0xff] %vm395, %v1020
          %1041 = vst.msk [vmem:[#allocation3 + $0x18] sm:$0xff] %vm395, %v1023
          %1042 = vst.msk [vmem:[#allocation3 + $0x20] sm:$0xff] %vm395, %v1026
          %1043 = vst.msk [vmem:[#allocation3 + $0x28] sm:$0xff] %vm395, %v1029
          %1044 = vst.msk [vmem:[#allocation3 + $0x30] sm:$0xff] %vm395, %v1032
          %1045 = vst.msk [vmem:[#allocation3 + $0x38] sm:$0xff] %vm395, %v1035
          %vm1046 = vcmask 516096
          %1047 = vst.msk [vmem:[#allocation4] sm:$0x1] %vm1046, %v1037
        $region60: #{tpu_custom_call.1} parent=51 // pred_fallthru
          _
      $region52: #{tpu_custom_call.1} parent=47 // pred_fallthru
        _
      %p1048 = scmp.eq.s32.totalorder %s24, 1
      // Predicated region
      $region61: #{tpu_custom_call.1} parent=47 // pred_check
        %p1049 = pneg %p1048
      $region62: #{tpu_custom_call.1} parent=47 // pred_check_branch
        %1051 = sbr.rel (%p1049) target = $region64
      $region63: #{tpu_custom_call.1} parent=47 // pred_region
        %v1052 = vld [vmem:[#allocation3] sm:$0xff]
        %v1053 = vld [vmem:[#allocation3 + $0x8] sm:$0xff]
        %v1054 = vld [vmem:[#allocation3 + $0x10] sm:$0xff]
        %v1055 = vld [vmem:[#allocation3 + $0x18] sm:$0xff]
        %v1056 = vld [vmem:[#allocation3 + $0x20] sm:$0xff]
        %v1057 = vld [vmem:[#allocation3 + $0x28] sm:$0xff]
        %v1058 = vld [vmem:[#allocation3 + $0x30] sm:$0xff]
        %v1059 = vld [vmem:[#allocation3 + $0x38] sm:$0xff]
        %v1060 = vld [vmem:[#allocation4] sm:$0x1]
        %v1062 = vperm.slane %v1060, 0
        %vm1064 = vcmask 523264
        %v1066 = vsel %vm1064, %v330, 0
        %v1069 = vsel %vm1064, %v331, 0
        %v1072 = vsel %vm1064, %v332, 0
        %v1075 = vsel %vm1064, %v333, 0
        %v1078 = vsel %vm1064, %v334, 0
        %v1081 = vsel %vm1064, %v335, 0
        %v1084 = vsel %vm1064, %v336, 0
        %v1087 = vsel %vm1064, %v337, 0
        %1089 = vmatpush.msra.mxu0 0.0
        %1090 = vmatpush.msra.mxu0 0.0
        %1091 = vmatpush.msra.mxu0 0.0
        %1092 = vmatpush.msra.mxu0 0.0
        %1093 = vmatpush.msra.mxu0 0.0
        %1094 = vmatpush.msra.mxu0 0.0
        %1095 = vmatpush.msra.mxu0 0.0
        %1096 = vmatpush.msra.mxu0 0.0
        %1097 = vmatpush.msra.mxu0 %v1059
        %1098 = vmatpush.msra.mxu0 %v1058
        %1099 = vmatpush.msra.mxu0 %v1057
        %1100 = vmatpush.msra.mxu0 %v1056
        %1101 = vmatpush.msra.mxu0 %v1055
        %1102 = vmatpush.msra.mxu0 %v1054
        %1103 = vmatpush.msra.mxu0 %v1053
        %1104 = vmatpush.msra.mxu0 %v1052
        %1105 = vmatmul.f32.gmra.mxu0 %v1066
        %v1106 = vpop.f32.mrf.mxu0
        %v1107 = vadd.f32 %v1062, %v1106
        %1108 = vmatmul.f32.gmra.mxu0 %v1069
        %v1109 = vpop.f32.mrf.mxu0
        %v1110 = vadd.f32 %v1062, %v1109
        %1111 = vmatmul.f32.gmra.mxu0 %v1072
        %v1112 = vpop.f32.mrf.mxu0
        %v1113 = vadd.f32 %v1062, %v1112
        %1114 = vmatmul.f32.gmra.mxu0 %v1075
        %v1115 = vpop.f32.mrf.mxu0
        %v1116 = vadd.f32 %v1062, %v1115
        %1117 = vmatmul.f32.gmra.mxu0 %v1078
        %v1118 = vpop.f32.mrf.mxu0
        %v1119 = vadd.f32 %v1062, %v1118
        %1120 = vmatmul.f32.gmra.mxu0 %v1081
        %v1121 = vpop.f32.mrf.mxu0
        %v1122 = vadd.f32 %v1062, %v1121
        %1123 = vmatmul.f32.gmra.mxu0 %v1084
        %v1124 = vpop.f32.mrf.mxu0
        %v1125 = vadd.f32 %v1062, %v1124
        %1126 = vmatmul.f32.gmra.mxu0 %v1087
        %v1127 = vpop.f32.mrf.mxu0
        %v1128 = vadd.f32 %v1062, %v1127
        %1129 = vdwg.mxu0
        %1130 = vst.msk [vmem:[%s327] sm:$0xff] %vm1064, %v1107
        %1131 = vst.msk [vmem:[%s327 + $0x8] sm:$0xff] %vm1064, %v1110
        %1132 = vst.msk [vmem:[%s327 + $0x10] sm:$0xff] %vm1064, %v1113
        %1133 = vst.msk [vmem:[%s327 + $0x18] sm:$0xff] %vm1064, %v1116
        %1134 = vst.msk [vmem:[%s327 + $0x20] sm:$0xff] %vm1064, %v1119
        %1135 = vst.msk [vmem:[%s327 + $0x28] sm:$0xff] %vm1064, %v1122
        %1136 = vst.msk [vmem:[%s327 + $0x30] sm:$0xff] %vm1064, %v1125
        %1137 = vst.msk [vmem:[%s327 + $0x38] sm:$0xff] %vm1064, %v1128
      $region64: #{tpu_custom_call.1} parent=47 // pred_fallthru
        _
      %s1138 = smul.u32 %s24, %s25
      %s1139 = smul.u32 8, %s1138
      %p1140 = scmp.lt.s32.totalorder %s23, 1
      %s1141 = scalar_select %p1140, %s23, 1
      %p1142 = scmp.lt.s32.totalorder %s1139, 31
      %s1143 = scalar_select %p1142, %s1139, 31
      %s1144 = smul.addr %s1141, 32
      %s1145 = sadd.s32 %s1143, %s1144
      %s1146 = smul.addr %s1145, 8
      %s1147 = scalar_lea.vmem %s7, %s1146
      // Predicated region
      $region65: #{tpu_custom_call.1} parent=47 // pred_check
        %p1148 = pneg %p213
      $region66: #{tpu_custom_call.1} parent=47 // pred_check_branch
        %1150 = sbr.rel (%p1148) target = $region68
      $region67: #{tpu_custom_call.1} parent=47 // pred_region
        %s1151 = smul.u32 %s24, %s25
        %s1152 = smul.u32 8, %s1151
      $region68: #{tpu_custom_call.1} parent=47 // pred_fallthru
        _
    $region48: #{tpu_custom_call.1} parent=5 // pred_fallthru
      _
    %p1153 = scmp.le.s32.totalorder 2, %s13
    // Predicated region
    $region69: #{tpu_custom_call.1} parent=5 // pred_check
      %p1154 = pneg %p1153
    $region70: #{tpu_custom_call.1} parent=5 // pred_check_branch
      %1156 = sbr.rel (%p1154) target = $region72
    $region71: #{tpu_custom_call.1} parent=5 // pred_region
      %s1157 = ssub.s32 %s13, 2
      // Predicated region
      $region73: #{tpu_custom_call.1} parent=71 // pred_check
        %p1158 = pneg %p219
      $region74: #{tpu_custom_call.1} parent=71 // pred_check_branch
        %1160 = sbr.rel (%p1158) target = $region76
      $region75: #{tpu_custom_call.1} parent=71 // pred_region
        %s1161 = smul.u32 %s27, %s28
        %s1162 = smul.u32 8, %s1161
        %p1163 = scmp.lt.s32.totalorder %s26, 1
        %s1164 = scalar_select %p1163, %s26, 1
        %p1165 = scmp.lt.s32.totalorder %s1162, 31
        %s1166 = scalar_select %p1165, %s1162, 31
        %s1167 = smul.addr %s1164, 32
        %s1168 = sadd.s32 %s1166, %s1167
        %s1169 = smul.addr %s1168, 8
        %s1170 = scalar_lea.vmem %s7, %s1169
      $region76: #{tpu_custom_call.1} parent=71 // pred_fallthru
        _
    $region72: #{tpu_custom_call.1} parent=5 // pred_fallthru
      _
  $region6: #{tpu_custom_call.1} parent=0 // loop_footer
    %s17 = sadd.s32 1, %s13
  $region7: #{tpu_custom_call.1} parent=0 // loop_footer_branch
    %12 = sbr.rel target = $region3
  $region8: #{tpu_custom_call.1} parent=0 // loop_exit
    _

</llo_original>
